<compile_context>
chip_gen: v5e
topology: v5e:2x2
jax: 0.10.0
libtpu: 0.0.40
codegen_flags: <defaults>
</compile_context>

<pallas_src>
import math

import jax
import jax.numpy as jnp
from jax.experimental import pallas as pl
from jax.experimental.pallas import tpu as pltpu

_LANES = 128
# Below this element count a fused XLA elementwise multiply beats the
# pallas_call launch + pipeline-setup overhead.
_PALLAS_MIN_ELEMS = 64 * 1024
# 512x128 tiles already reach ~85% of HBM roofline; going below only adds
# per-step overhead.
_MIN_BLOCK_ROWS = 512
# 4 MiB per block -> <= 16 MiB with double-buffered in+out; fits every
# generation's VMEM comfortably.
_MAX_BLOCK_BYTES = 4 << 20


def _zero_scale_kernel(x_ref, o_ref):
    # Literal `0.0 * x` to match PyTorch semantics (incl. NaN/Inf propagation).
    o_ref[...] = x_ref[...] * jnp.asarray(0.0, dtype=x_ref.dtype)


def _sublanes_for(dtype) -> int:
    # Native packed tile height: 8 sublanes of 32-bit; sub-32-bit dtypes pack
    # 2x / 4x rows per sublane group.
    itemsize = jnp.dtype(dtype).itemsize
    return max(8, 32 // max(1, itemsize))


def _cores_per_device() -> int:
    """Best-effort TensorCore count per device (2 on v7x, 1 on v5e/v6e)."""
    try:
        dev = jax.devices()[0]
        nc = getattr(dev, "num_cores", None)
        if isinstance(nc, int) and nc > 0:
            return nc
        kind = str(getattr(dev, "device_kind", "")).lower()
        if "v7" in kind:
            return 2
    except Exception:
        pass
    return 1


def clamp_forward(x: jax.Array, should_clamp: bool = False,
                  donate_input: bool = False) -> jax.Array:
    """Pallas equivalent of Clamp.forward. `should_clamp` is static."""
    if not should_clamp:
        # Identity branch: PyTorch returns input_ unchanged -> no kernel.
        return x

    dtype = x.dtype
    shape = x.shape
    total = math.prod(shape) if shape else 1

    # Small or non-lane-aligned inputs: a single fused XLA multiply already
    # runs at HBM roofline; padding/slicing around a Pallas call would only
    # add extra HBM traffic and launch overhead.
    if total < _PALLAS_MIN_ELEMS or total % _LANES != 0:
        return x * jnp.asarray(0.0, dtype=dtype)

    itemsize = jnp.dtype(dtype).itemsize
    sublanes = _sublanes_for(dtype)
    rows = total // _LANES
    flat2d = x.reshape(rows, _LANES)  # free, lane-dense view

    # Block sizing: aim for >= ~4 grid steps per TensorCore so consecutive
    # steps' input/output DMAs overlap, floored at 512 rows and capped so one
    # block is <= 4 MiB (double-buffered in+out <= 16 MiB VMEM).
    target_steps = 4 * _cores_per_device()
    max_block_rows = max(_MIN_BLOCK_ROWS, _MAX_BLOCK_BYTES // (_LANES * itemsize))
    ideal = pl.cdiv(rows, target_steps)
    ideal = pl.cdiv(ideal, sublanes) * sublanes  # multiple of packed tile height
    block_rows = min(max(ideal, _MIN_BLOCK_ROWS), max_block_rows)
    block_rows = min(block_rows, pl.cdiv(rows, sublanes) * sublanes)

    grid = (pl.cdiv(rows, block_rows),)

    # VMEM budget from the real footprint: double-buffered input + output.
    block_bytes = block_rows * _LANES * itemsize
    vmem_limit = min(128 << 20, 4 * block_bytes + (2 << 20))

    out = pl.pallas_call(
        _zero_scale_kernel,
        out_shape=jax.ShapeDtypeStruct((rows, _LANES), dtype),
        grid=grid,
        in_specs=[pl.BlockSpec((block_rows, _LANES), lambda i: (i, 0))],
        out_specs=pl.BlockSpec((block_rows, _LANES), lambda i: (i, 0)),
        compiler_params=pltpu.CompilerParams(
            dimension_semantics=("parallel",),
            vmem_limit_bytes=vmem_limit,
        ),
        input_output_aliases=({0: 0} if donate_input else {}),
    )(flat2d)

    return out.reshape(shape)


if __name__ == "__main__":
    key = jax.random.PRNGKey(0)
    k1, k2, k3 = jax.random.split(key, 3)

    # Module-scale small input (batch=2, channels=4, 16x16): XLA fast path.
    x_small = jax.random.normal(k1, (2, 4, 16, 16), dtype=jnp.float32)
    y_identity = clamp_forward(x_small, should_clamp=False)
    y_small = clamp_forward(x_small, should_clamp=True)

    # Larger lane-aligned f32 input exercising the Pallas kernel path.
    x_f32 = jax.random.normal(k2, (8, 64, 32, 32), dtype=jnp.float32)
    y_f32 = clamp_forward(x_f32, should_clamp=True)

    # bf16 input exercising the dtype-aware (16-sublane) tiling.
    x_bf16 = jax.random.normal(k3, (4, 32, 32, 32), dtype=jnp.bfloat16)
    y_bf16 = clamp_forward(x_bf16, should_clamp=True)

    jax.block_until_ready((y_identity, y_small, y_f32, y_bf16))

    assert y_identity.shape == x_small.shape and y_identity.dtype == x_small.dtype
    assert jnp.array_equal(y_identity, x_small)

    assert y_small.shape == x_small.shape and y_small.dtype == x_small.dtype
    assert not jnp.any(y_small)

    assert y_f32.shape == x_f32.shape and y_f32.dtype == x_f32.dtype
    assert not jnp.any(y_f32)

    assert y_bf16.shape == x_bf16.shape and y_bf16.dtype == x_bf16.dtype
    assert not jnp.any(y_bf16)

    print("KERNEL_OK")
</pallas_src>

<mosaic_0001>
module attributes {stable_mosaic.version = 11 : i64} {
  func.func @_zero_scale_kernel(%arg0: i32, %arg1: memref<1024x128xf32, #tpu.memory_space<vmem>>, %arg2: memref<1024x128xf32, #tpu.memory_space<vmem>>) attributes {dimension_semantics = [#tpu.dimension_semantics<parallel>], iteration_bounds = array<i64: 4>, scalar_prefetch = 0 : i64, scratch_operands = 0 : i64, tpu.core_type = #tpu.core_type<tc>, window_params = [{transform_indices = @transform_0, window_bounds = array<i64: 1024, 128>}, {transform_indices = @transform_1, window_bounds = array<i64: 1024, 128>}]} {
    %c0 = arith.constant 0 : index
    %c0_0 = arith.constant 0 : index
    %0 = vector.load %arg1[%c0, %c0_0] : memref<1024x128xf32, #tpu.memory_space<vmem>>, vector<1024x128xf32>
    %cst = arith.constant 0.000000e+00 : f32
    %1 = vector.broadcast %cst : f32 to vector<1024x128xf32>
    %2 = arith.mulf %0, %1 : vector<1024x128xf32>
    %c0_1 = arith.constant 0 : index
    %c0_2 = arith.constant 0 : index
    %3 = vector.load %arg2[%c0_1, %c0_2] : memref<1024x128xf32, #tpu.memory_space<vmem>>, vector<1024x128xf32>
    tpu.vector_store %arg2[%c0_1, %c0_2], %2 {strides = array<i32>} : memref<1024x128xf32, #tpu.memory_space<vmem>>, vector<1024x128xf32>,
    return
  }
  func.func @transform_0(%arg0: i32) -> (i32, i32) {
    %c0_i32 = arith.constant 0 : i32
    %c0_i32_0 = arith.constant 0 : i32
    return %arg0, %c0_i32 : i32, i32
  }
  func.func @transform_1(%arg0: i32) -> (i32, i32) {
    %c0_i32 = arith.constant 0 : i32
    %c0_i32_0 = arith.constant 0 : i32
    return %arg0, %c0_i32 : i32, i32
  }
}

</mosaic_0001>

<llo_original>
// kernel: tpu_custom_call.1
$region0: #{tpu_custom_call.1}
  #allocation0 [shape = 'u32[]', space=smem, size = 0x4, offset = 0x4, fixed_abs, tag = 'smem constant byte address 0x4 - core index']
  #allocation1 [shape = 'u32[72,128]{1,0:T(1,128)}', space=vmem, size = 0x9000, scoped, tag = 'internal scratch']
  %s0 = inlined_call_operand.hbm [shape: f32[4096,128], index: 0, kind: input, shape index: {}]
  %s1 = inlined_call_operand.hbm [shape: f32[4096,128], index: 1, kind: output, shape index: {}]
  %s2 = sld [smem:[#allocation0]]
  $region41: #{tpu_custom_call.1} parent=0
    _
  %s4 = ssub.s32 1, %s2
  %s5 = scalar_select 0, %s4, %s2
  $region1: #{tpu_custom_call.1} parent=0
    #allocation2 [shape = 'u8[1048576]{0}', space=vmem, size = 0x100000, scoped, tag = 'input window, operand 0']
    #allocation3 [shape = 's32[2]{0}', space=sflag, size = 0x8, scoped, tag = 'scoped memory for tpu_custom_call.1']
    #allocation4 [shape = 's32[2]{0}', space=sflag, size = 0x8, scoped, tag = 'scoped memory for tpu_custom_call.1']
    #allocation5 [shape = 'u8[1048576]{0}', space=vmem, size = 0x100000, scoped, tag = 'output window, operand 0']
    %6 = vsyncpa [#allocation3], 0
    %s7 = scalar_lea.sflag [#allocation3], 1
    %8 = vsyncpa %s7, 0
    %9 = vsyncpa [#allocation4], 0
    %s10 = scalar_lea.sflag [#allocation4], 1
    %11 = vsyncpa %s10, 0
    loop: start=0, step=1, limit=6
    $region2: #{tpu_custom_call.1} parent=1 // loop_pre_header
      _
    $region3: #{tpu_custom_call.1} parent=1 // loop_header
      %s13 = sphi 0, %s17
      %p14 = scmp.ge.s32.totalorder %s13, 6
      %s23 = sphi 0, %s25
      %s26 = sphi 0, %s23
      %s27 = sphi 0, %s26
      %s43 = sphi 0, %s27
      %s49 = sphi 0, %s51
      %s52 = sphi 0, %s49
      %s53 = sphi 0, %s52
      %s69 = sphi 0, %s53
    $region4: #{tpu_custom_call.1} parent=1 // loop_header_branch
      %16 = sbr.rel (%p14) target = $region8
    $region5: #{tpu_custom_call.1} parent=1 // loop_body
      %s18 = ssub.s32 %s13, 1
      %s19 = ssub.s32 %s13, 2
      %s20 = sadd.s32 %s13, 1
      %s21 = ssub.s32 %s13, %s20
      %p22 = scmp.eq.s32.totalorder %s21, 0
      %s24 = sadd.s32 %s23, 1
      %s25 = scalar_select %p22, %s23, %s24
      %p28 = pneg %p22
      %p29 = scmp.eq.s32.totalorder %s13, 3
      %p30 = por %p28, %p29
      %p31 = scmp.ne.s32.totalorder %s23, %s26
      %p32 = scmp.eq.s32.totalorder %s13, 0
      %p33 = por %p31, %p32
      %p34 = scmp.ne.s32.totalorder %s23, %s26
      %p35 = scmp.eq.s32.totalorder %s18, 3
      %p36 = por %p34, %p35
      %p37 = scmp.ne.s32.totalorder %s26, %s27
      %p38 = scmp.eq.s32.totalorder %s18, 0
      %p39 = por %p37, %p38
      %p40 = scmp.ne.s32.totalorder %s26, %s27
      %p41 = scmp.eq.s32.totalorder %s19, 3
      %p42 = por %p40, %p41
      %p44 = scmp.ne.s32.totalorder %s27, %s43
      %p45 = scmp.eq.s32.totalorder %s19, 0
      %p46 = por %p44, %p45
      %s47 = ssub.s32 %s13, %s20
      %p48 = scmp.eq.s32.totalorder %s47, 0
      %s50 = sadd.s32 %s49, 1
      %s51 = scalar_select %p48, %s49, %s50
      %p54 = pneg %p48
      %p55 = scmp.eq.s32.totalorder %s13, 3
      %p56 = por %p54, %p55
      %p57 = scmp.ne.s32.totalorder %s49, %s52
      %p58 = scmp.eq.s32.totalorder %s13, 0
      %p59 = por %p57, %p58
      %p60 = scmp.ne.s32.totalorder %s49, %s52
      %p61 = scmp.eq.s32.totalorder %s18, 3
      %p62 = por %p60, %p61
      %p63 = scmp.ne.s32.totalorder %s52, %s53
      %p64 = scmp.eq.s32.totalorder %s18, 0
      %p65 = por %p63, %p64
      %p66 = scmp.ne.s32.totalorder %s52, %s53
      %p67 = scmp.eq.s32.totalorder %s19, 3
      %p68 = por %p66, %p67
      %p70 = scmp.ne.s32.totalorder %s53, %s69
      %p71 = scmp.eq.s32.totalorder %s19, 0
      %p72 = por %p70, %p71
      %p73 = scmp.le.s32.totalorder 1, %s13
      %p74 = scmp.lt.s32.totalorder %s13, 5
      %p75 = pnand %p73, %p74
      %p76 = pneg %p75
      // Predicated region
      $region9: #{tpu_custom_call.1} parent=5 // pred_check
        _
      $region10: #{tpu_custom_call.1} parent=5 // pred_check_branch
        %78 = sbr.rel (%p75) target = $region12
      $region11: #{tpu_custom_call.1} parent=5 // pred_region
        %s79 = ssub.s32 %s13, 1
      $region12: #{tpu_custom_call.1} parent=5 // pred_fallthru
        _
      %p80 = scmp.lt.s32.totalorder %s13, 4
      // Predicated region
      $region13: #{tpu_custom_call.1} parent=5 // pred_check
        %p81 = pneg %p80
      $region14: #{tpu_custom_call.1} parent=5 // pred_check_branch
        %83 = sbr.rel (%p81) target = $region16
      $region15: #{tpu_custom_call.1} parent=5 // pred_region
        // Predicated region
        $region17: #{tpu_custom_call.1} parent=15 // pred_check
          %p84 = pneg %p33
        $region18: #{tpu_custom_call.1} parent=15 // pred_check_branch
          %86 = sbr.rel (%p84) target = $region20
        $region19: #{tpu_custom_call.1} parent=15 // pred_region
          %s87 = sand.u32 %s23, 1
          %s88 = scalar_lea.sflag [#allocation3], %s87
          %s89 = sand.u32 %s23, 1
          %s90 = smul.addr %s89, 1024
          %s91 = scalar_lea.vmem [#allocation2], %s90
          %s92 = smul.u32 128, %s13
          %94 = vsyncadd %s88, 0
          %s95 = smul.addr %s92, 8
          %s96 = scalar_lea.hbm %s0, %s95
          %s97 = sshll.u32 %s96, 4
          %s98 = int_to_ptr.hbm [resolvable:$true] %s97
          %s99 = sshll.u32 %s91, 4
          %s100 = int_to_ptr.vmem [resolvable:$true] %s99
          %105 = dma.hbm_to_vmem [thread:$0]  %s98, 16384, %s100, %s88, 128, 128, 8
        $region20: #{tpu_custom_call.1} parent=15 // pred_fallthru
          _
      $region16: #{tpu_custom_call.1} parent=5 // pred_fallthru
        _
      %p106 = scmp.le.s32.totalorder 1, %s13
      %p107 = scmp.lt.s32.totalorder %s13, 5
      %p108 = pnand %p106, %p107
      %p109 = pneg %p108
      // Predicated region
      $region21: #{tpu_custom_call.1} parent=5 // pred_check
        _
      $region22: #{tpu_custom_call.1} parent=5 // pred_check_branch
        %111 = sbr.rel (%p108) target = $region24
      $region23: #{tpu_custom_call.1} parent=5 // pred_region
        %s112 = ssub.s32 %s13, 1
        %s113 = sand.u32 %s26, 1
        %s114 = scalar_lea.sflag [#allocation3], %s113
        %s115 = sand.u32 %s26, 1
        %s116 = smul.addr %s115, 1024
        %s117 = scalar_lea.vmem [#allocation2], %s116
        // Predicated region
        $region25: #{tpu_custom_call.1} parent=23 // pred_check
          %p118 = pneg %p39
        $region26: #{tpu_custom_call.1} parent=23 // pred_check_branch
          %120 = sbr.rel (%p118) target = $region28
        $region27: #{tpu_custom_call.1} parent=23 // pred_region
          %122 = dma.done %s114, 16384
        $region28: #{tpu_custom_call.1} parent=23 // pred_fallthru
          _
        %s123 = sand.u32 %s26, 1
        %s124 = scalar_lea.sflag [#allocation3], %s123
        %s125 = sand.u32 %s26, 1
        %s126 = smul.addr %s125, 1024
        %s127 = scalar_lea.vmem [#allocation2], %s126
        %p128 = pneg %p39
        %p129 = pneg %p36
        %p130 = pneg %p65
        %p131 = pneg %p62
        %s132 = sand.u32 %s52, 1
        %s133 = scalar_lea.sflag [#allocation4], %s132
        %s134 = sand.u32 %s52, 1
        %s135 = smul.addr %s134, 1024
        %s136 = scalar_lea.vmem [#allocation5], %s135
        %s137 = smul.u32 128, %s18
        %s138 = smul.u32 128, %s18
        %v139 = vld [vmem:[%s117] sm:$0xff]
        %v140 = vld [vmem:[%s117 + $0x8] sm:$0xff]
        %v141 = vld [vmem:[%s117 + $0x10] sm:$0xff]
        %v142 = vld [vmem:[%s117 + $0x18] sm:$0xff]
        %v143 = vld [vmem:[%s117 + $0x20] sm:$0xff]
        %v144 = vld [vmem:[%s117 + $0x28] sm:$0xff]
        %v145 = vld [vmem:[%s117 + $0x30] sm:$0xff]
        %v146 = vld [vmem:[%s117 + $0x38] sm:$0xff]
        %v147 = vld [vmem:[%s117 + $0x40] sm:$0xff]
        %v148 = vld [vmem:[%s117 + $0x48] sm:$0xff]
        %v149 = vld [vmem:[%s117 + $0x50] sm:$0xff]
        %v150 = vld [vmem:[%s117 + $0x58] sm:$0xff]
        %v151 = vld [vmem:[%s117 + $0x60] sm:$0xff]
        %v152 = vld [vmem:[%s117 + $0x68] sm:$0xff]
        %v153 = vld [vmem:[%s117 + $0x70] sm:$0xff]
        %v154 = vld [vmem:[%s117 + $0x78] sm:$0xff]
        %v155 = vld [vmem:[%s117 + $0x80] sm:$0xff]
        %v156 = vld [vmem:[%s117 + $0x88] sm:$0xff]
        %v157 = vld [vmem:[%s117 + $0x90] sm:$0xff]
        %v158 = vld [vmem:[%s117 + $0x98] sm:$0xff]
        %v159 = vld [vmem:[%s117 + $0xa0] sm:$0xff]
        %v160 = vld [vmem:[%s117 + $0xa8] sm:$0xff]
        %v161 = vld [vmem:[%s117 + $0xb0] sm:$0xff]
        %v162 = vld [vmem:[%s117 + $0xb8] sm:$0xff]
        %v163 = vld [vmem:[%s117 + $0xc0] sm:$0xff]
        %v164 = vld [vmem:[%s117 + $0xc8] sm:$0xff]
        %v165 = vld [vmem:[%s117 + $0xd0] sm:$0xff]
        %v166 = vld [vmem:[%s117 + $0xd8] sm:$0xff]
        %v167 = vld [vmem:[%s117 + $0xe0] sm:$0xff]
        %v168 = vld [vmem:[%s117 + $0xe8] sm:$0xff]
        %v169 = vld [vmem:[%s117 + $0xf0] sm:$0xff]
        %v170 = vld [vmem:[%s117 + $0xf8] sm:$0xff]
        %v171 = vld [vmem:[%s117 + $0x100] sm:$0xff]
        %v172 = vld [vmem:[%s117 + $0x108] sm:$0xff]
        %v173 = vld [vmem:[%s117 + $0x110] sm:$0xff]
        %v174 = vld [vmem:[%s117 + $0x118] sm:$0xff]
        %v175 = vld [vmem:[%s117 + $0x120] sm:$0xff]
        %v176 = vld [vmem:[%s117 + $0x128] sm:$0xff]
        %v177 = vld [vmem:[%s117 + $0x130] sm:$0xff]
        %v178 = vld [vmem:[%s117 + $0x138] sm:$0xff]
        %v179 = vld [vmem:[%s117 + $0x140] sm:$0xff]
        %v180 = vld [vmem:[%s117 + $0x148] sm:$0xff]
        %v181 = vld [vmem:[%s117 + $0x150] sm:$0xff]
        %v182 = vld [vmem:[%s117 + $0x158] sm:$0xff]
        %v183 = vld [vmem:[%s117 + $0x160] sm:$0xff]
        %v184 = vld [vmem:[%s117 + $0x168] sm:$0xff]
        %v185 = vld [vmem:[%s117 + $0x170] sm:$0xff]
        %v186 = vld [vmem:[%s117 + $0x178] sm:$0xff]
        %v187 = vld [vmem:[%s117 + $0x180] sm:$0xff]
        %v188 = vld [vmem:[%s117 + $0x188] sm:$0xff]
        %v189 = vld [vmem:[%s117 + $0x190] sm:$0xff]
        %v190 = vld [vmem:[%s117 + $0x198] sm:$0xff]
        %v191 = vld [vmem:[%s117 + $0x1a0] sm:$0xff]
        %v192 = vld [vmem:[%s117 + $0x1a8] sm:$0xff]
        %v193 = vld [vmem:[%s117 + $0x1b0] sm:$0xff]
        %v194 = vld [vmem:[%s117 + $0x1b8] sm:$0xff]
        %v195 = vld [vmem:[%s117 + $0x1c0] sm:$0xff]
        %v196 = vld [vmem:[%s117 + $0x1c8] sm:$0xff]
        %v197 = vld [vmem:[%s117 + $0x1d0] sm:$0xff]
        %v198 = vld [vmem:[%s117 + $0x1d8] sm:$0xff]
        %v199 = vld [vmem:[%s117 + $0x1e0] sm:$0xff]
        %v200 = vld [vmem:[%s117 + $0x1e8] sm:$0xff]
        %v201 = vld [vmem:[%s117 + $0x1f0] sm:$0xff]
        %v202 = vld [vmem:[%s117 + $0x1f8] sm:$0xff]
        %v203 = vld [vmem:[%s117 + $0x200] sm:$0xff]
        %v204 = vld [vmem:[%s117 + $0x208] sm:$0xff]
        %v205 = vld [vmem:[%s117 + $0x210] sm:$0xff]
        %v206 = vld [vmem:[%s117 + $0x218] sm:$0xff]
        %v207 = vld [vmem:[%s117 + $0x220] sm:$0xff]
        %v208 = vld [vmem:[%s117 + $0x228] sm:$0xff]
        %v209 = vld [vmem:[%s117 + $0x230] sm:$0xff]
        %v210 = vld [vmem:[%s117 + $0x238] sm:$0xff]
        %v211 = vld [vmem:[%s117 + $0x240] sm:$0xff]
        %v212 = vld [vmem:[%s117 + $0x248] sm:$0xff]
        %v213 = vld [vmem:[%s117 + $0x250] sm:$0xff]
        %v214 = vld [vmem:[%s117 + $0x258] sm:$0xff]
        %v215 = vld [vmem:[%s117 + $0x260] sm:$0xff]
        %v216 = vld [vmem:[%s117 + $0x268] sm:$0xff]
        %v217 = vld [vmem:[%s117 + $0x270] sm:$0xff]
        %v218 = vld [vmem:[%s117 + $0x278] sm:$0xff]
        %v219 = vld [vmem:[%s117 + $0x280] sm:$0xff]
        %v220 = vld [vmem:[%s117 + $0x288] sm:$0xff]
        %v221 = vld [vmem:[%s117 + $0x290] sm:$0xff]
        %v222 = vld [vmem:[%s117 + $0x298] sm:$0xff]
        %v223 = vld [vmem:[%s117 + $0x2a0] sm:$0xff]
        %v224 = vld [vmem:[%s117 + $0x2a8] sm:$0xff]
        %v225 = vld [vmem:[%s117 + $0x2b0] sm:$0xff]
        %v226 = vld [vmem:[%s117 + $0x2b8] sm:$0xff]
        %v227 = vld [vmem:[%s117 + $0x2c0] sm:$0xff]
        %v228 = vld [vmem:[%s117 + $0x2c8] sm:$0xff]
        %v229 = vld [vmem:[%s117 + $0x2d0] sm:$0xff]
        %v230 = vld [vmem:[%s117 + $0x2d8] sm:$0xff]
        %v231 = vld [vmem:[%s117 + $0x2e0] sm:$0xff]
        %v232 = vld [vmem:[%s117 + $0x2e8] sm:$0xff]
        %v233 = vld [vmem:[%s117 + $0x2f0] sm:$0xff]
        %v234 = vld [vmem:[%s117 + $0x2f8] sm:$0xff]
        %v235 = vld [vmem:[%s117 + $0x300] sm:$0xff]
        %v236 = vld [vmem:[%s117 + $0x308] sm:$0xff]
        %v237 = vld [vmem:[%s117 + $0x310] sm:$0xff]
        %v238 = vld [vmem:[%s117 + $0x318] sm:$0xff]
        %v239 = vld [vmem:[%s117 + $0x320] sm:$0xff]
        %v240 = vld [vmem:[%s117 + $0x328] sm:$0xff]
        %v241 = vld [vmem:[%s117 + $0x330] sm:$0xff]
        %v242 = vld [vmem:[%s117 + $0x338] sm:$0xff]
        %v243 = vld [vmem:[%s117 + $0x340] sm:$0xff]
        %v244 = vld [vmem:[%s117 + $0x348] sm:$0xff]
        %v245 = vld [vmem:[%s117 + $0x350] sm:$0xff]
        %v246 = vld [vmem:[%s117 + $0x358] sm:$0xff]
        %v247 = vld [vmem:[%s117 + $0x360] sm:$0xff]
        %v248 = vld [vmem:[%s117 + $0x368] sm:$0xff]
        %v249 = vld [vmem:[%s117 + $0x370] sm:$0xff]
        %v250 = vld [vmem:[%s117 + $0x378] sm:$0xff]
        %v251 = vld [vmem:[%s117 + $0x380] sm:$0xff]
        %v252 = vld [vmem:[%s117 + $0x388] sm:$0xff]
        %v253 = vld [vmem:[%s117 + $0x390] sm:$0xff]
        %v254 = vld [vmem:[%s117 + $0x398] sm:$0xff]
        %v255 = vld [vmem:[%s117 + $0x3a0] sm:$0xff]
        %v256 = vld [vmem:[%s117 + $0x3a8] sm:$0xff]
        %v257 = vld [vmem:[%s117 + $0x3b0] sm:$0xff]
        %v258 = vld [vmem:[%s117 + $0x3b8] sm:$0xff]
        %v259 = vld [vmem:[%s117 + $0x3c0] sm:$0xff]
        %v260 = vld [vmem:[%s117 + $0x3c8] sm:$0xff]
        %v261 = vld [vmem:[%s117 + $0x3d0] sm:$0xff]
        %v262 = vld [vmem:[%s117 + $0x3d8] sm:$0xff]
        %v263 = vld [vmem:[%s117 + $0x3e0] sm:$0xff]
        %v264 = vld [vmem:[%s117 + $0x3e8] sm:$0xff]
        %v265 = vld [vmem:[%s117 + $0x3f0] sm:$0xff]
        %v266 = vld [vmem:[%s117 + $0x3f8] sm:$0xff]
        %v267 = vmul.f32 %v139, 0.0
        %v268 = vmul.f32 %v140, 0.0
        %v269 = vmul.f32 %v141, 0.0
        %v270 = vmul.f32 %v142, 0.0
        %v271 = vmul.f32 %v143, 0.0
        %v272 = vmul.f32 %v144, 0.0
        %v273 = vmul.f32 %v145, 0.0
        %v274 = vmul.f32 %v146, 0.0
        %v275 = vmul.f32 %v147, 0.0
        %v276 = vmul.f32 %v148, 0.0
        %v277 = vmul.f32 %v149, 0.0
        %v278 = vmul.f32 %v150, 0.0
        %v279 = vmul.f32 %v151, 0.0
        %v280 = vmul.f32 %v152, 0.0
        %v281 = vmul.f32 %v153, 0.0
        %v282 = vmul.f32 %v154, 0.0
        %v283 = vmul.f32 %v155, 0.0
        %v284 = vmul.f32 %v156, 0.0
        %v285 = vmul.f32 %v157, 0.0
        %v286 = vmul.f32 %v158, 0.0
        %v287 = vmul.f32 %v159, 0.0
        %v288 = vmul.f32 %v160, 0.0
        %v289 = vmul.f32 %v161, 0.0
        %v290 = vmul.f32 %v162, 0.0
        %v291 = vmul.f32 %v163, 0.0
        %v292 = vmul.f32 %v164, 0.0
        %v293 = vmul.f32 %v165, 0.0
        %v294 = vmul.f32 %v166, 0.0
        %v295 = vmul.f32 %v167, 0.0
        %v296 = vmul.f32 %v168, 0.0
        %v297 = vmul.f32 %v169, 0.0
        %v298 = vmul.f32 %v170, 0.0
        %v299 = vmul.f32 %v171, 0.0
        %v300 = vmul.f32 %v172, 0.0
        %v301 = vmul.f32 %v173, 0.0
        %v302 = vmul.f32 %v174, 0.0
        %v303 = vmul.f32 %v175, 0.0
        %v304 = vmul.f32 %v176, 0.0
        %v305 = vmul.f32 %v177, 0.0
        %v306 = vmul.f32 %v178, 0.0
        %v307 = vmul.f32 %v179, 0.0
        %v308 = vmul.f32 %v180, 0.0
        %v309 = vmul.f32 %v181, 0.0
        %v310 = vmul.f32 %v182, 0.0
        %v311 = vmul.f32 %v183, 0.0
        %v312 = vmul.f32 %v184, 0.0
        %v313 = vmul.f32 %v185, 0.0
        %v314 = vmul.f32 %v186, 0.0
        %v315 = vmul.f32 %v187, 0.0
        %v316 = vmul.f32 %v188, 0.0
        %v317 = vmul.f32 %v189, 0.0
        %v318 = vmul.f32 %v190, 0.0
        %v319 = vmul.f32 %v191, 0.0
        %v320 = vmul.f32 %v192, 0.0
        %v321 = vmul.f32 %v193, 0.0
        %v322 = vmul.f32 %v194, 0.0
        %v323 = vmul.f32 %v195, 0.0
        %v324 = vmul.f32 %v196, 0.0
        %v325 = vmul.f32 %v197, 0.0
        %v326 = vmul.f32 %v198, 0.0
        %v327 = vmul.f32 %v199, 0.0
        %v328 = vmul.f32 %v200, 0.0
        %v329 = vmul.f32 %v201, 0.0
        %v330 = vmul.f32 %v202, 0.0
        %v331 = vmul.f32 %v203, 0.0
        %v332 = vmul.f32 %v204, 0.0
        %v333 = vmul.f32 %v205, 0.0
        %v334 = vmul.f32 %v206, 0.0
        %v335 = vmul.f32 %v207, 0.0
        %v336 = vmul.f32 %v208, 0.0
        %v337 = vmul.f32 %v209, 0.0
        %v338 = vmul.f32 %v210, 0.0
        %v339 = vmul.f32 %v211, 0.0
        %v340 = vmul.f32 %v212, 0.0
        %v341 = vmul.f32 %v213, 0.0
        %v342 = vmul.f32 %v214, 0.0
        %v343 = vmul.f32 %v215, 0.0
        %v344 = vmul.f32 %v216, 0.0
        %v345 = vmul.f32 %v217, 0.0
        %v346 = vmul.f32 %v218, 0.0
        %v347 = vmul.f32 %v219, 0.0
        %v348 = vmul.f32 %v220, 0.0
        %v349 = vmul.f32 %v221, 0.0
        %v350 = vmul.f32 %v222, 0.0
        %v351 = vmul.f32 %v223, 0.0
        %v352 = vmul.f32 %v224, 0.0
        %v353 = vmul.f32 %v225, 0.0
        %v354 = vmul.f32 %v226, 0.0
        %v355 = vmul.f32 %v227, 0.0
        %v356 = vmul.f32 %v228, 0.0
        %v357 = vmul.f32 %v229, 0.0
        %v358 = vmul.f32 %v230, 0.0
        %v359 = vmul.f32 %v231, 0.0
        %v360 = vmul.f32 %v232, 0.0
        %v361 = vmul.f32 %v233, 0.0
        %v362 = vmul.f32 %v234, 0.0
        %v363 = vmul.f32 %v235, 0.0
        %v364 = vmul.f32 %v236, 0.0
        %v365 = vmul.f32 %v237, 0.0
        %v366 = vmul.f32 %v238, 0.0
        %v367 = vmul.f32 %v239, 0.0
        %v368 = vmul.f32 %v240, 0.0
        %v369 = vmul.f32 %v241, 0.0
        %v370 = vmul.f32 %v242, 0.0
        %v371 = vmul.f32 %v243, 0.0
        %v372 = vmul.f32 %v244, 0.0
        %v373 = vmul.f32 %v245, 0.0
        %v374 = vmul.f32 %v246, 0.0
        %v375 = vmul.f32 %v247, 0.0
        %v376 = vmul.f32 %v248, 0.0
        %v377 = vmul.f32 %v249, 0.0
        %v378 = vmul.f32 %v250, 0.0
        %v379 = vmul.f32 %v251, 0.0
        %v380 = vmul.f32 %v252, 0.0
        %v381 = vmul.f32 %v253, 0.0
        %v382 = vmul.f32 %v254, 0.0
        %v383 = vmul.f32 %v255, 0.0
        %v384 = vmul.f32 %v256, 0.0
        %v385 = vmul.f32 %v257, 0.0
        %v386 = vmul.f32 %v258, 0.0
        %v387 = vmul.f32 %v259, 0.0
        %v388 = vmul.f32 %v260, 0.0
        %v389 = vmul.f32 %v261, 0.0
        %v390 = vmul.f32 %v262, 0.0
        %v391 = vmul.f32 %v263, 0.0
        %v392 = vmul.f32 %v264, 0.0
        %v393 = vmul.f32 %v265, 0.0
        %v394 = vmul.f32 %v266, 0.0
        %395 = vst [vmem:[%s136] sm:$0xff] %v267
        %396 = vst [vmem:[%s136 + $0x8] sm:$0xff] %v268
        %397 = vst [vmem:[%s136 + $0x10] sm:$0xff] %v269
        %398 = vst [vmem:[%s136 + $0x18] sm:$0xff] %v270
        %399 = vst [vmem:[%s136 + $0x20] sm:$0xff] %v271
        %400 = vst [vmem:[%s136 + $0x28] sm:$0xff] %v272
        %401 = vst [vmem:[%s136 + $0x30] sm:$0xff] %v273
        %402 = vst [vmem:[%s136 + $0x38] sm:$0xff] %v274
        %403 = vst [vmem:[%s136 + $0x40] sm:$0xff] %v275
        %404 = vst [vmem:[%s136 + $0x48] sm:$0xff] %v276
        %405 = vst [vmem:[%s136 + $0x50] sm:$0xff] %v277
        %406 = vst [vmem:[%s136 + $0x58] sm:$0xff] %v278
        %407 = vst [vmem:[%s136 + $0x60] sm:$0xff] %v279
        %408 = vst [vmem:[%s136 + $0x68] sm:$0xff] %v280
        %409 = vst [vmem:[%s136 + $0x70] sm:$0xff] %v281
        %410 = vst [vmem:[%s136 + $0x78] sm:$0xff] %v282
        %411 = vst [vmem:[%s136 + $0x80] sm:$0xff] %v283
        %412 = vst [vmem:[%s136 + $0x88] sm:$0xff] %v284
        %413 = vst [vmem:[%s136 + $0x90] sm:$0xff] %v285
        %414 = vst [vmem:[%s136 + $0x98] sm:$0xff] %v286
        %415 = vst [vmem:[%s136 + $0xa0] sm:$0xff] %v287
        %416 = vst [vmem:[%s136 + $0xa8] sm:$0xff] %v288
        %417 = vst [vmem:[%s136 + $0xb0] sm:$0xff] %v289
        %418 = vst [vmem:[%s136 + $0xb8] sm:$0xff] %v290
        %419 = vst [vmem:[%s136 + $0xc0] sm:$0xff] %v291
        %420 = vst [vmem:[%s136 + $0xc8] sm:$0xff] %v292
        %421 = vst [vmem:[%s136 + $0xd0] sm:$0xff] %v293
        %422 = vst [vmem:[%s136 + $0xd8] sm:$0xff] %v294
        %423 = vst [vmem:[%s136 + $0xe0] sm:$0xff] %v295
        %424 = vst [vmem:[%s136 + $0xe8] sm:$0xff] %v296
        %425 = vst [vmem:[%s136 + $0xf0] sm:$0xff] %v297
        %426 = vst [vmem:[%s136 + $0xf8] sm:$0xff] %v298
        %427 = vst [vmem:[%s136 + $0x100] sm:$0xff] %v299
        %428 = vst [vmem:[%s136 + $0x108] sm:$0xff] %v300
        %429 = vst [vmem:[%s136 + $0x110] sm:$0xff] %v301
        %430 = vst [vmem:[%s136 + $0x118] sm:$0xff] %v302
        %431 = vst [vmem:[%s136 + $0x120] sm:$0xff] %v303
        %432 = vst [vmem:[%s136 + $0x128] sm:$0xff] %v304
        %433 = vst [vmem:[%s136 + $0x130] sm:$0xff] %v305
        %434 = vst [vmem:[%s136 + $0x138] sm:$0xff] %v306
        %435 = vst [vmem:[%s136 + $0x140] sm:$0xff] %v307
        %436 = vst [vmem:[%s136 + $0x148] sm:$0xff] %v308
        %437 = vst [vmem:[%s136 + $0x150] sm:$0xff] %v309
        %438 = vst [vmem:[%s136 + $0x158] sm:$0xff] %v310
        %439 = vst [vmem:[%s136 + $0x160] sm:$0xff] %v311
        %440 = vst [vmem:[%s136 + $0x168] sm:$0xff] %v312
        %441 = vst [vmem:[%s136 + $0x170] sm:$0xff] %v313
        %442 = vst [vmem:[%s136 + $0x178] sm:$0xff] %v314
        %443 = vst [vmem:[%s136 + $0x180] sm:$0xff] %v315
        %444 = vst [vmem:[%s136 + $0x188] sm:$0xff] %v316
        %445 = vst [vmem:[%s136 + $0x190] sm:$0xff] %v317
        %446 = vst [vmem:[%s136 + $0x198] sm:$0xff] %v318
        %447 = vst [vmem:[%s136 + $0x1a0] sm:$0xff] %v319
        %448 = vst [vmem:[%s136 + $0x1a8] sm:$0xff] %v320
        %449 = vst [vmem:[%s136 + $0x1b0] sm:$0xff] %v321
        %450 = vst [vmem:[%s136 + $0x1b8] sm:$0xff] %v322
        %451 = vst [vmem:[%s136 + $0x1c0] sm:$0xff] %v323
        %452 = vst [vmem:[%s136 + $0x1c8] sm:$0xff] %v324
        %453 = vst [vmem:[%s136 + $0x1d0] sm:$0xff] %v325
        %454 = vst [vmem:[%s136 + $0x1d8] sm:$0xff] %v326
        %455 = vst [vmem:[%s136 + $0x1e0] sm:$0xff] %v327
        %456 = vst [vmem:[%s136 + $0x1e8] sm:$0xff] %v328
        %457 = vst [vmem:[%s136 + $0x1f0] sm:$0xff] %v329
        %458 = vst [vmem:[%s136 + $0x1f8] sm:$0xff] %v330
        %459 = vst [vmem:[%s136 + $0x200] sm:$0xff] %v331
        %460 = vst [vmem:[%s136 + $0x208] sm:$0xff] %v332
        %461 = vst [vmem:[%s136 + $0x210] sm:$0xff] %v333
        %462 = vst [vmem:[%s136 + $0x218] sm:$0xff] %v334
        %463 = vst [vmem:[%s136 + $0x220] sm:$0xff] %v335
        %464 = vst [vmem:[%s136 + $0x228] sm:$0xff] %v336
        %465 = vst [vmem:[%s136 + $0x230] sm:$0xff] %v337
        %466 = vst [vmem:[%s136 + $0x238] sm:$0xff] %v338
        %467 = vst [vmem:[%s136 + $0x240] sm:$0xff] %v339
        %468 = vst [vmem:[%s136 + $0x248] sm:$0xff] %v340
        %469 = vst [vmem:[%s136 + $0x250] sm:$0xff] %v341
        %470 = vst [vmem:[%s136 + $0x258] sm:$0xff] %v342
        %471 = vst [vmem:[%s136 + $0x260] sm:$0xff] %v343
        %472 = vst [vmem:[%s136 + $0x268] sm:$0xff] %v344
        %473 = vst [vmem:[%s136 + $0x270] sm:$0xff] %v345
        %474 = vst [vmem:[%s136 + $0x278] sm:$0xff] %v346
        %475 = vst [vmem:[%s136 + $0x280] sm:$0xff] %v347
        %476 = vst [vmem:[%s136 + $0x288] sm:$0xff] %v348
        %477 = vst [vmem:[%s136 + $0x290] sm:$0xff] %v349
        %478 = vst [vmem:[%s136 + $0x298] sm:$0xff] %v350
        %479 = vst [vmem:[%s136 + $0x2a0] sm:$0xff] %v351
        %480 = vst [vmem:[%s136 + $0x2a8] sm:$0xff] %v352
        %481 = vst [vmem:[%s136 + $0x2b0] sm:$0xff] %v353
        %482 = vst [vmem:[%s136 + $0x2b8] sm:$0xff] %v354
        %483 = vst [vmem:[%s136 + $0x2c0] sm:$0xff] %v355
        %484 = vst [vmem:[%s136 + $0x2c8] sm:$0xff] %v356
        %485 = vst [vmem:[%s136 + $0x2d0] sm:$0xff] %v357
        %486 = vst [vmem:[%s136 + $0x2d8] sm:$0xff] %v358
        %487 = vst [vmem:[%s136 + $0x2e0] sm:$0xff] %v359
        %488 = vst [vmem:[%s136 + $0x2e8] sm:$0xff] %v360
        %489 = vst [vmem:[%s136 + $0x2f0] sm:$0xff] %v361
        %490 = vst [vmem:[%s136 + $0x2f8] sm:$0xff] %v362
        %491 = vst [vmem:[%s136 + $0x300] sm:$0xff] %v363
        %492 = vst [vmem:[%s136 + $0x308] sm:$0xff] %v364
        %493 = vst [vmem:[%s136 + $0x310] sm:$0xff] %v365
        %494 = vst [vmem:[%s136 + $0x318] sm:$0xff] %v366
        %495 = vst [vmem:[%s136 + $0x320] sm:$0xff] %v367
        %496 = vst [vmem:[%s136 + $0x328] sm:$0xff] %v368
        %497 = vst [vmem:[%s136 + $0x330] sm:$0xff] %v369
        %498 = vst [vmem:[%s136 + $0x338] sm:$0xff] %v370
        %499 = vst [vmem:[%s136 + $0x340] sm:$0xff] %v371
        %500 = vst [vmem:[%s136 + $0x348] sm:$0xff] %v372
        %501 = vst [vmem:[%s136 + $0x350] sm:$0xff] %v373
        %502 = vst [vmem:[%s136 + $0x358] sm:$0xff] %v374
        %503 = vst [vmem:[%s136 + $0x360] sm:$0xff] %v375
        %504 = vst [vmem:[%s136 + $0x368] sm:$0xff] %v376
        %505 = vst [vmem:[%s136 + $0x370] sm:$0xff] %v377
        %506 = vst [vmem:[%s136 + $0x378] sm:$0xff] %v378
        %507 = vst [vmem:[%s136 + $0x380] sm:$0xff] %v379
        %508 = vst [vmem:[%s136 + $0x388] sm:$0xff] %v380
        %509 = vst [vmem:[%s136 + $0x390] sm:$0xff] %v381
        %510 = vst [vmem:[%s136 + $0x398] sm:$0xff] %v382
        %511 = vst [vmem:[%s136 + $0x3a0] sm:$0xff] %v383
        %512 = vst [vmem:[%s136 + $0x3a8] sm:$0xff] %v384
        %513 = vst [vmem:[%s136 + $0x3b0] sm:$0xff] %v385
        %514 = vst [vmem:[%s136 + $0x3b8] sm:$0xff] %v386
        %515 = vst [vmem:[%s136 + $0x3c0] sm:$0xff] %v387
        %516 = vst [vmem:[%s136 + $0x3c8] sm:$0xff] %v388
        %517 = vst [vmem:[%s136 + $0x3d0] sm:$0xff] %v389
        %518 = vst [vmem:[%s136 + $0x3d8] sm:$0xff] %v390
        %519 = vst [vmem:[%s136 + $0x3e0] sm:$0xff] %v391
        %520 = vst [vmem:[%s136 + $0x3e8] sm:$0xff] %v392
        %521 = vst [vmem:[%s136 + $0x3f0] sm:$0xff] %v393
        %522 = vst [vmem:[%s136 + $0x3f8] sm:$0xff] %v394
        %s523 = sand.u32 %s52, 1
        %s524 = scalar_lea.sflag [#allocation4], %s523
        %s525 = sand.u32 %s52, 1
        %s526 = smul.addr %s525, 1024
        %s527 = scalar_lea.vmem [#allocation5], %s526
        // Predicated region
        $region29: #{tpu_custom_call.1} parent=23 // pred_check
          %p528 = pneg %p62
        $region30: #{tpu_custom_call.1} parent=23 // pred_check_branch
          %530 = sbr.rel (%p528) target = $region32
        $region31: #{tpu_custom_call.1} parent=23 // pred_region
          %s531 = smul.u32 128, %s18
          %533 = vsyncadd %s524, 0
          %s534 = smul.addr %s531, 8
          %s535 = scalar_lea.hbm %s1, %s534
          %s536 = sshll.u32 %s527, 4
          %s537 = int_to_ptr.vmem [resolvable:$true] %s536
          %s538 = sshll.u32 %s535, 4
          %s539 = int_to_ptr.hbm [resolvable:$true] %s538
          %544 = dma.vmem_to_hbm [thread:$0]  %s537, 16384, %s539, %s524, 128, 128, 8
        $region32: #{tpu_custom_call.1} parent=23 // pred_fallthru
          _
      $region24: #{tpu_custom_call.1} parent=5 // pred_fallthru
        _
      %p545 = scmp.le.s32.totalorder 2, %s13
      // Predicated region
      $region33: #{tpu_custom_call.1} parent=5 // pred_check
        %p546 = pneg %p545
      $region34: #{tpu_custom_call.1} parent=5 // pred_check_branch
        %548 = sbr.rel (%p546) target = $region36
      $region35: #{tpu_custom_call.1} parent=5 // pred_region
        %s549 = ssub.s32 %s13, 2
        // Predicated region
        $region37: #{tpu_custom_call.1} parent=35 // pred_check
          %p550 = pneg %p68
        $region38: #{tpu_custom_call.1} parent=35 // pred_check_branch
          %552 = sbr.rel (%p550) target = $region40
        $region39: #{tpu_custom_call.1} parent=35 // pred_region
          %s553 = sand.u32 %s53, 1
          %s554 = scalar_lea.sflag [#allocation4], %s553
          %s555 = sand.u32 %s53, 1
          %s556 = smul.addr %s555, 1024
          %s557 = scalar_lea.vmem [#allocation5], %s556
          %559 = dma.done %s554, 16384
        $region40: #{tpu_custom_call.1} parent=35 // pred_fallthru
          _
      $region36: #{tpu_custom_call.1} parent=5 // pred_fallthru
        _
    $region6: #{tpu_custom_call.1} parent=1 // loop_footer
      %s17 = sadd.s32 1, %s13
    $region7: #{tpu_custom_call.1} parent=1 // loop_footer_branch
      %12 = sbr.rel target = $region3
    $region8: #{tpu_custom_call.1} parent=1 // loop_exit
      _
    %560 = vsyncpa [#allocation3], 1
    %s561 = scalar_lea.sflag [#allocation3], 1
    %562 = vsyncpa %s561, 1
    %563 = vsyncpa [#allocation4], 1
    %s564 = scalar_lea.sflag [#allocation4], 1
    %565 = vsyncpa %s564, 1

</llo_original>
